<compile_context>
chip_gen: v6e
topology: v6e:2x2x1
jax: 0.10.0
libtpu: 0.0.40
codegen_flags: <defaults>
</compile_context>

<pallas_src>
import jax
import jax.numpy as jnp
from jax.experimental import pallas as pl
from jax.experimental.pallas import tpu as pltpu


def _round_up(a: int, m: int) -> int:
    return ((a + m - 1) // m) * m


def _largest_dividing_tile(total: int, cap: int, step: int = 128) -> int:
    """Largest multiple of `step` that divides `total` and is <= cap.

    `total` must itself be a multiple of `step`, so `step` always qualifies.
    """
    best = step
    t = step
    while t <= min(cap, total):
        if total % t == 0:
            best = t
        t += step
    return best


# -----------------------------------------------------------------------------
# Kernel: grid = (M/tm, N/tn, K/tk), K innermost (reduction).  A float32 VMEM
# accumulator persists across the K axis; bias add + temperature scaling run
# once in the epilogue.  inv_t (=1/T) arrives via scalar prefetch in SMEM.
# -----------------------------------------------------------------------------
def _temp_scaled_linear_kernel(inv_t_ref, x_ref, w_ref, b_ref, o_ref, acc_ref):
    k = pl.program_id(2)

    @pl.when(k == 0)
    def _():
        acc_ref[...] = jnp.zeros_like(acc_ref)

    acc_ref[...] += jnp.dot(
        x_ref[...], w_ref[...], preferred_element_type=jnp.float32
    )

    @pl.when(k == pl.num_programs(2) - 1)
    def _():
        # Bias + temperature scaling only once per output tile; inv_t_ref[0]
        # is 1/T (one scalar multiply per lane, no divide).
        o_ref[...] = ((acc_ref[...] + b_ref[...]) * inv_t_ref[0]).astype(o_ref.dtype)


def prepare_classifier_params(w, b, dtype=jnp.float32):
    """One-time (load-time) padding + cast of classifier weights.

    Hoisted out of the per-call forward so the extra HBM pass over W happens
    once, not every inference call.  Pass dtype=jnp.bfloat16 on v6e/v5e to
    halve W streaming bytes (kernel accumulation stays f32); validate against
    the deployment tolerance before enabling.
    """
    D, C = w.shape
    Dp = _round_up(D, 128)
    # Small-C heads: keep the class dim un-padded (full-last-dim blocks are
    # exempt from the 128-lane rule).  Padding C=8 -> 128 would inflate the
    # dominant W byte stream 16x on an HBM-bound kernel.
    Cp = C if C <= 128 else _round_up(C, 128)
    wp = jnp.pad(w.astype(jnp.float32), ((0, Dp - D), (0, Cp - C))).astype(dtype)
    bp = jnp.pad(b.astype(jnp.float32).reshape(1, C), ((0, 0), (0, Cp - C)))
    return wp, bp


@jax.jit
def temperature_scaled_forward(x_nchw, wp, bp, temperature):
    """logits = flatten(x) @ W + b, scaled by 1/temperature.

    x_nchw: (B, C_in, H, W); wp/bp: outputs of prepare_classifier_params;
    temperature: traced f32 scalar (distinct values do NOT retrigger compile).
    Returns (B, Cp) float32; Cp == num_classes whenever num_classes <= 128.
    """
    B = x_nchw.shape[0]
    Dp, Cp = wp.shape

    x2d = x_nchw.reshape(B, -1).astype(wp.dtype)  # matches torch.flatten(x, 1)
    D = x2d.shape[1]

    # ---- tile sizes ---------------------------------------------------------
    # Larger tm directly divides W re-streaming (W is streamed Bp/tm times).
    tm = min(256, _round_up(B, 8))
    Bp = _round_up(B, tm)
    tn = Cp if Cp <= 128 else _largest_dividing_tile(Cp, 512)
    tk = _largest_dividing_tile(Dp, 2048)
    # VMEM budget check (v7x: 64 MiB physical / 32 MiB scoped default):
    # 2*(tm*tk + tk*tn + tm*tn)*itemsize + tm*tn*4 <= ~9 MiB at f32 with these
    # caps, so no vmem_limit_bytes override is required on any generation.

    # Pad x only when its shape actually requires it (e.g. B up to 8 sublanes).
    if (Bp, Dp) != (B, D):
        x2d = jnp.pad(x2d, ((0, Bp - B), (0, Dp - D)))

    inv_t = (1.0 / temperature).astype(jnp.float32).reshape((1,))

    grid = (Bp // tm, Cp // tn, Dp // tk)

    itemsize = jnp.dtype(wp.dtype).itemsize
    cost = pl.CostEstimate(
        flops=2 * Bp * Dp * Cp,
        transcendentals=0,
        bytes_accessed=(Bp * Dp + Dp * Cp) * itemsize + (Cp + Bp * Cp) * 4,
    )

    out = pl.pallas_call(
        _temp_scaled_linear_kernel,
        out_shape=jax.ShapeDtypeStruct((Bp, Cp), jnp.float32),
        grid_spec=pltpu.PrefetchScalarGridSpec(
            num_scalar_prefetch=1,  # inv_t lands in SMEM before the grid runs
            grid=grid,
            in_specs=[
                pl.BlockSpec((tm, tk), lambda i, j, k, s: (i, k)),  # x
                pl.BlockSpec((tk, tn), lambda i, j, k, s: (k, j)),  # W
                pl.BlockSpec((1, tn), lambda i, j, k, s: (0, j)),   # bias
            ],
            out_specs=pl.BlockSpec((tm, tn), lambda i, j, k, s: (i, j)),
            scratch_shapes=[pltpu.VMEM((tm, tn), jnp.float32)],
        ),
        compiler_params=pltpu.CompilerParams(
            dimension_semantics=("parallel", "parallel", "arbitrary"),
        ),
        cost_estimate=cost,
    )(inv_t, x2d, wp, bp)

    # Slice padded batch rows off; class dim is already exact when C <= 128.
    return out[:B]


if __name__ == "__main__":
    key = jax.random.PRNGKey(0)
    kx, kw, kb = jax.random.split(key, 3)

    # Small shapes consistent with an image classifier wrapped by
    # TemperatureScaledModel.
    B, Cin, H, W = 2, 4, 16, 16
    num_classes = 8
    D = Cin * H * W
    temperature = 1.5

    x = jax.random.normal(kx, (B, Cin, H, W), dtype=jnp.float32)
    # Deterministic synthetic "model" parameters (linear classifier head).
    w = jax.random.normal(kw, (D, num_classes), dtype=jnp.float32) * 0.02
    bias = jax.random.normal(kb, (num_classes,), dtype=jnp.float32) * 0.02

    # One-time weight prep (padding/cast hoisted out of the hot path).
    wp, bp = prepare_classifier_params(w, bias)

    out = temperature_scaled_forward(x, wp, bp, temperature)
    out = jax.block_until_ready(out)

    # Reference check in plain JAX (logits / temperature semantics).
    ref = (x.reshape(B, D) @ w + bias) / temperature
    assert out.shape == (B, num_classes)
    assert jnp.allclose(out, ref, atol=1e-4, rtol=1e-4)

    print("KERNEL_OK")
</pallas_src>

<mosaic_0001>
module attributes {stable_mosaic.version = 11 : i64} {
  func.func @_temp_scaled_linear_kernel(%arg0: i32, %arg1: i32, %arg2: i32, %arg3: memref<1xf32, #tpu.memory_space<smem>>, %arg4: memref<8x1024xf32, #tpu.memory_space<vmem>>, %arg5: memref<1024x8xf32, #tpu.memory_space<vmem>>, %arg6: memref<1x8xf32, #tpu.memory_space<vmem>>, %arg7: memref<8x8xf32, #tpu.memory_space<vmem>>, %arg8: memref<8x8xf32, #tpu.memory_space<vmem>>) attributes {dimension_semantics = [#tpu.dimension_semantics<parallel>, #tpu.dimension_semantics<parallel>, #tpu.dimension_semantics<arbitrary>], iteration_bounds = array<i64: 1, 1, 1>, scalar_prefetch = 1 : i64, scratch_operands = 1 : i64, tpu.core_type = #tpu.core_type<tc>, window_params = [{transform_indices = @transform_0, window_bounds = array<i64: 8, 1024>}, {transform_indices = @transform_1, window_bounds = array<i64: 1024, 8>}, {transform_indices = @transform_2, window_bounds = array<i64: 1, 8>}, {transform_indices = @transform_3, window_bounds = array<i64: 8, 8>}]} {
    %c0_i32 = arith.constant 0 : i32
    %0 = arith.cmpi eq, %arg2, %c0_i32 : i32
    %1 = arith.extui %0 : i1 to i32
    %c0_i32_0 = arith.constant 0 : i32
    %2 = arith.cmpi ne, %1, %c0_i32_0 : i32
    scf.if %2 {
      %cst_10 = arith.constant 0.000000e+00 : f32
      %12 = vector.broadcast %cst_10 : f32 to vector<8x8xf32>
      %c0_11 = arith.constant 0 : index
      %c0_12 = arith.constant 0 : index
      %13 = vector.load %arg8[%c0_11, %c0_12] : memref<8x8xf32, #tpu.memory_space<vmem>>, vector<8x8xf32>
      tpu.vector_store %arg8[%c0_11, %c0_12], %12 {strides = array<i32>} : memref<8x8xf32, #tpu.memory_space<vmem>>, vector<8x8xf32>,
    } else {
    }
    %c0 = arith.constant 0 : index
    %c0_1 = arith.constant 0 : index
    %3 = vector.load %arg8[%c0, %c0_1] : memref<8x8xf32, #tpu.memory_space<vmem>>, vector<8x8xf32>
    %c0_2 = arith.constant 0 : index
    %c0_3 = arith.constant 0 : index
    %4 = vector.load %arg4[%c0_2, %c0_3] : memref<8x1024xf32, #tpu.memory_space<vmem>>, vector<8x1024xf32>
    %c0_4 = arith.constant 0 : index
    %c0_5 = arith.constant 0 : index
    %5 = vector.load %arg5[%c0_4, %c0_5] : memref<1024x8xf32, #tpu.memory_space<vmem>>, vector<1024x8xf32>
    %cst = arith.constant dense<0.000000e+00> : vector<8x8xf32>
    %6 = tpu.matmul %4, %5, %cst {dimension_numbers = #tpu.dot_dimension_numbers<[1], [0], [0], [1], [0, 0, 1, 1], [], []>} : vector<8x1024xf32>, vector<1024x8xf32>, vector<8x8xf32> -> vector<8x8xf32>
    %7 = arith.addf %3, %6 : vector<8x8xf32>
    %c0_6 = arith.constant 0 : index
    %c0_7 = arith.constant 0 : index
    %8 = vector.load %arg8[%c0_6, %c0_7] : memref<8x8xf32, #tpu.memory_space<vmem>>, vector<8x8xf32>
    tpu.vector_store %arg8[%c0_6, %c0_7], %7 {strides = array<i32>} : memref<8x8xf32, #tpu.memory_space<vmem>>, vector<8x8xf32>,
    %c0_i32_8 = arith.constant 0 : i32
    %9 = arith.cmpi eq, %arg2, %c0_i32_8 : i32
    %10 = arith.extui %9 : i1 to i32
    %c0_i32_9 = arith.constant 0 : i32
    %11 = arith.cmpi ne, %10, %c0_i32_9 : i32
    scf.if %11 {
      %c0_10 = arith.constant 0 : index
      %c0_11 = arith.constant 0 : index
      %12 = vector.load %arg8[%c0_10, %c0_11] : memref<8x8xf32, #tpu.memory_space<vmem>>, vector<8x8xf32>
      %c0_12 = arith.constant 0 : index
      %c0_13 = arith.constant 0 : index
      %13 = vector.load %arg6[%c0_12, %c0_13] : memref<1x8xf32, #tpu.memory_space<vmem>>, vector<1x8xf32>
      %14 = vector.broadcast %13 : vector<1x8xf32> to vector<8x8xf32>
      %15 = arith.addf %12, %14 : vector<8x8xf32>
      %c0_14 = arith.constant 0 : index
      %16 = memref.load %arg3[%c0_14] : memref<1xf32, #tpu.memory_space<smem>>
      %17 = vector.broadcast %16 : f32 to vector<8x8xf32>
      %18 = arith.mulf %15, %17 : vector<8x8xf32>
      %c0_15 = arith.constant 0 : index
      %c0_16 = arith.constant 0 : index
      %19 = vector.load %arg7[%c0_15, %c0_16] : memref<8x8xf32, #tpu.memory_space<vmem>>, vector<8x8xf32>
      tpu.vector_store %arg7[%c0_15, %c0_16], %18 {strides = array<i32>} : memref<8x8xf32, #tpu.memory_space<vmem>>, vector<8x8xf32>,
    } else {
    }
    return
  }
  func.func @transform_0(%arg0: i32, %arg1: i32, %arg2: i32, %arg3: memref<1xf32, #tpu.memory_space<smem>>) -> (i32, i32) {
    %c0_i32 = arith.constant 0 : i32
    return %arg0, %arg2 : i32, i32
  }
  func.func @transform_1(%arg0: i32, %arg1: i32, %arg2: i32, %arg3: memref<1xf32, #tpu.memory_space<smem>>) -> (i32, i32) {
    %c0_i32 = arith.constant 0 : i32
    return %arg2, %arg1 : i32, i32
  }
  func.func @transform_2(%arg0: i32, %arg1: i32, %arg2: i32, %arg3: memref<1xf32, #tpu.memory_space<smem>>) -> (i32, i32) {
    %c0_i32 = arith.constant 0 : i32
    %c0_i32_0 = arith.constant 0 : i32
    return %c0_i32, %arg1 : i32, i32
  }
  func.func @transform_3(%arg0: i32, %arg1: i32, %arg2: i32, %arg3: memref<1xf32, #tpu.memory_space<smem>>) -> (i32, i32) {
    %c0_i32 = arith.constant 0 : i32
    return %arg0, %arg1 : i32, i32
  }
}

</mosaic_0001>

<llo_original>
// kernel: temperature_scaled_forward.1
$region0: #{temperature_scaled_forward.1}
  #allocation0 [shape = 'u32[]', space=smem, size = 0x4, offset = 0x4, fixed_abs, tag = 'smem constant byte address 0x4 - core index']
  #allocation1 [shape = 'u32[144,128]{1,0:T(1,128)}', space=vmem, size = 0x12000, scoped, tag = 'internal scratch']
  #allocation2 [shape = 'f32[8,8]{1,0:T(8,128)}', space=vmem, size = 0x1000, scoped, tag = 'scratch operand']
  #allocation3 [shape = 's32[1]{0}', space=sflag, size = 0x4, scoped, tag = 'scoped memory for temperature_scaled_forward.1']
  #allocation4 [shape = 'f32[1]{0:T(128)S(6)}', space=smem, size = 0x200, scoped, tag = 'prefetched SMEM operand 0']
  %s0 = inlined_call_operand.<no memory space> [shape: f32[1], index: 0, kind: input, shape index: {}]
  %s1 = inlined_call_operand.vmem [shape: f32[8,1024], index: 1, kind: input, shape index: {}]
  %s2 = inlined_call_operand.vmem [shape: f32[1024,8], index: 2, kind: input, shape index: {}]
  %s3 = inlined_call_operand.vmem [shape: f32[1,8], index: 3, kind: input, shape index: {}]
  %s4 = inlined_call_operand.vmem [shape: f32[8,8], index: 4, kind: output, shape index: {}]
  %s5 = sld [smem:[#allocation0]]
  $region30: #{temperature_scaled_forward.1} parent=0
    _
  %s7 = ssub.s32 1, %s5
  %s8 = scalar_select 0, %s7, %s5
  %9 = sst [smem:[#allocation4]] %s0
  // Predicated region
  $region2: #{temperature_scaled_forward.1} parent=0 // pred_check
    _
  $region3: #{temperature_scaled_forward.1} parent=0 // pred_check_branch
    %11 = sbr.rel (0) target = $region5
  $region4: #{temperature_scaled_forward.1} parent=0 // pred_region
    _
  $region5: #{temperature_scaled_forward.1} parent=0 // pred_fallthru
    _
  // Predicated region
  $region6: #{temperature_scaled_forward.1} parent=0 // pred_check
    _
  $region7: #{temperature_scaled_forward.1} parent=0 // pred_check_branch
    %13 = sbr.rel (0) target = $region9
  $region8: #{temperature_scaled_forward.1} parent=0 // pred_region
    _
  $region9: #{temperature_scaled_forward.1} parent=0 // pred_fallthru
    _
  // Predicated region
  $region10: #{temperature_scaled_forward.1} parent=0 // pred_check
    _
  $region11: #{temperature_scaled_forward.1} parent=0 // pred_check_branch
    %15 = sbr.rel (0) target = $region13
  $region12: #{temperature_scaled_forward.1} parent=0 // pred_region
    _
  $region13: #{temperature_scaled_forward.1} parent=0 // pred_fallthru
    _
  %p16 = scmp.eq.s32.totalorder 0, 0
  // Predicated region
  $region14: #{temperature_scaled_forward.1} parent=0 // pred_check
    %p17 = pneg %p16
  $region15: #{temperature_scaled_forward.1} parent=0 // pred_check_branch
    %19 = sbr.rel (%p17) target = $region17
  $region16: #{temperature_scaled_forward.1} parent=0 // pred_region
    %vm20 = vcmask 64512
    %21 = vst.msk [vmem:[#allocation2] sm:$0xff] %vm20, 0.0
  $region17: #{temperature_scaled_forward.1} parent=0 // pred_fallthru
    _
  %v22 = vld [vmem:[#allocation2] sm:$0xff]
  %v23 = vld [vmem:[%s1] sm:$0xff]
  %v24 = vld [vmem:[%s1 + $0x8] sm:$0xff]
  %v25 = vld [vmem:[%s1 + $0x10] sm:$0xff]
  %v26 = vld [vmem:[%s1 + $0x18] sm:$0xff]
  %v27 = vld [vmem:[%s1 + $0x20] sm:$0xff]
  %v28 = vld [vmem:[%s1 + $0x28] sm:$0xff]
  %v29 = vld [vmem:[%s1 + $0x30] sm:$0xff]
  %v30 = vld [vmem:[%s1 + $0x38] sm:$0xff]
  %v31 = vld [vmem:[%s2] sm:$0xff]
  %v32 = vld [vmem:[%s2 + $0x8] sm:$0xff]
  %v33 = vld [vmem:[%s2 + $0x10] sm:$0xff]
  %v34 = vld [vmem:[%s2 + $0x18] sm:$0xff]
  %v35 = vld [vmem:[%s2 + $0x20] sm:$0xff]
  %v36 = vld [vmem:[%s2 + $0x28] sm:$0xff]
  %v37 = vld [vmem:[%s2 + $0x30] sm:$0xff]
  %v38 = vld [vmem:[%s2 + $0x38] sm:$0xff]
  %v39 = vld [vmem:[%s2 + $0x40] sm:$0xff]
  %v40 = vld [vmem:[%s2 + $0x48] sm:$0xff]
  %v41 = vld [vmem:[%s2 + $0x50] sm:$0xff]
  %v42 = vld [vmem:[%s2 + $0x58] sm:$0xff]
  %v43 = vld [vmem:[%s2 + $0x60] sm:$0xff]
  %v44 = vld [vmem:[%s2 + $0x68] sm:$0xff]
  %v45 = vld [vmem:[%s2 + $0x70] sm:$0xff]
  %v46 = vld [vmem:[%s2 + $0x78] sm:$0xff]
  %v47 = vld [vmem:[%s2 + $0x80] sm:$0xff]
  %v48 = vld [vmem:[%s2 + $0x88] sm:$0xff]
  %v49 = vld [vmem:[%s2 + $0x90] sm:$0xff]
  %v50 = vld [vmem:[%s2 + $0x98] sm:$0xff]
  %v51 = vld [vmem:[%s2 + $0xa0] sm:$0xff]
  %v52 = vld [vmem:[%s2 + $0xa8] sm:$0xff]
  %v53 = vld [vmem:[%s2 + $0xb0] sm:$0xff]
  %v54 = vld [vmem:[%s2 + $0xb8] sm:$0xff]
  %v55 = vld [vmem:[%s2 + $0xc0] sm:$0xff]
  %v56 = vld [vmem:[%s2 + $0xc8] sm:$0xff]
  %v57 = vld [vmem:[%s2 + $0xd0] sm:$0xff]
  %v58 = vld [vmem:[%s2 + $0xd8] sm:$0xff]
  %v59 = vld [vmem:[%s2 + $0xe0] sm:$0xff]
  %v60 = vld [vmem:[%s2 + $0xe8] sm:$0xff]
  %v61 = vld [vmem:[%s2 + $0xf0] sm:$0xff]
  %v62 = vld [vmem:[%s2 + $0xf8] sm:$0xff]
  %v63 = vld [vmem:[%s2 + $0x100] sm:$0xff]
  %v64 = vld [vmem:[%s2 + $0x108] sm:$0xff]
  %v65 = vld [vmem:[%s2 + $0x110] sm:$0xff]
  %v66 = vld [vmem:[%s2 + $0x118] sm:$0xff]
  %v67 = vld [vmem:[%s2 + $0x120] sm:$0xff]
  %v68 = vld [vmem:[%s2 + $0x128] sm:$0xff]
  %v69 = vld [vmem:[%s2 + $0x130] sm:$0xff]
  %v70 = vld [vmem:[%s2 + $0x138] sm:$0xff]
  %v71 = vld [vmem:[%s2 + $0x140] sm:$0xff]
  %v72 = vld [vmem:[%s2 + $0x148] sm:$0xff]
  %v73 = vld [vmem:[%s2 + $0x150] sm:$0xff]
  %v74 = vld [vmem:[%s2 + $0x158] sm:$0xff]
  %v75 = vld [vmem:[%s2 + $0x160] sm:$0xff]
  %v76 = vld [vmem:[%s2 + $0x168] sm:$0xff]
  %v77 = vld [vmem:[%s2 + $0x170] sm:$0xff]
  %v78 = vld [vmem:[%s2 + $0x178] sm:$0xff]
  %v79 = vld [vmem:[%s2 + $0x180] sm:$0xff]
  %v80 = vld [vmem:[%s2 + $0x188] sm:$0xff]
  %v81 = vld [vmem:[%s2 + $0x190] sm:$0xff]
  %v82 = vld [vmem:[%s2 + $0x198] sm:$0xff]
  %v83 = vld [vmem:[%s2 + $0x1a0] sm:$0xff]
  %v84 = vld [vmem:[%s2 + $0x1a8] sm:$0xff]
  %v85 = vld [vmem:[%s2 + $0x1b0] sm:$0xff]
  %v86 = vld [vmem:[%s2 + $0x1b8] sm:$0xff]
  %v87 = vld [vmem:[%s2 + $0x1c0] sm:$0xff]
  %v88 = vld [vmem:[%s2 + $0x1c8] sm:$0xff]
  %v89 = vld [vmem:[%s2 + $0x1d0] sm:$0xff]
  %v90 = vld [vmem:[%s2 + $0x1d8] sm:$0xff]
  %v91 = vld [vmem:[%s2 + $0x1e0] sm:$0xff]
  %v92 = vld [vmem:[%s2 + $0x1e8] sm:$0xff]
  %v93 = vld [vmem:[%s2 + $0x1f0] sm:$0xff]
  %v94 = vld [vmem:[%s2 + $0x1f8] sm:$0xff]
  %v95 = vld [vmem:[%s2 + $0x200] sm:$0xff]
  %v96 = vld [vmem:[%s2 + $0x208] sm:$0xff]
  %v97 = vld [vmem:[%s2 + $0x210] sm:$0xff]
  %v98 = vld [vmem:[%s2 + $0x218] sm:$0xff]
  %v99 = vld [vmem:[%s2 + $0x220] sm:$0xff]
  %v100 = vld [vmem:[%s2 + $0x228] sm:$0xff]
  %v101 = vld [vmem:[%s2 + $0x230] sm:$0xff]
  %v102 = vld [vmem:[%s2 + $0x238] sm:$0xff]
  %v103 = vld [vmem:[%s2 + $0x240] sm:$0xff]
  %v104 = vld [vmem:[%s2 + $0x248] sm:$0xff]
  %v105 = vld [vmem:[%s2 + $0x250] sm:$0xff]
  %v106 = vld [vmem:[%s2 + $0x258] sm:$0xff]
  %v107 = vld [vmem:[%s2 + $0x260] sm:$0xff]
  %v108 = vld [vmem:[%s2 + $0x268] sm:$0xff]
  %v109 = vld [vmem:[%s2 + $0x270] sm:$0xff]
  %v110 = vld [vmem:[%s2 + $0x278] sm:$0xff]
  %v111 = vld [vmem:[%s2 + $0x280] sm:$0xff]
  %v112 = vld [vmem:[%s2 + $0x288] sm:$0xff]
  %v113 = vld [vmem:[%s2 + $0x290] sm:$0xff]
  %v114 = vld [vmem:[%s2 + $0x298] sm:$0xff]
  %v115 = vld [vmem:[%s2 + $0x2a0] sm:$0xff]
  %v116 = vld [vmem:[%s2 + $0x2a8] sm:$0xff]
  %v117 = vld [vmem:[%s2 + $0x2b0] sm:$0xff]
  %v118 = vld [vmem:[%s2 + $0x2b8] sm:$0xff]
  %v119 = vld [vmem:[%s2 + $0x2c0] sm:$0xff]
  %v120 = vld [vmem:[%s2 + $0x2c8] sm:$0xff]
  %v121 = vld [vmem:[%s2 + $0x2d0] sm:$0xff]
  %v122 = vld [vmem:[%s2 + $0x2d8] sm:$0xff]
  %v123 = vld [vmem:[%s2 + $0x2e0] sm:$0xff]
  %v124 = vld [vmem:[%s2 + $0x2e8] sm:$0xff]
  %v125 = vld [vmem:[%s2 + $0x2f0] sm:$0xff]
  %v126 = vld [vmem:[%s2 + $0x2f8] sm:$0xff]
  %v127 = vld [vmem:[%s2 + $0x300] sm:$0xff]
  %v128 = vld [vmem:[%s2 + $0x308] sm:$0xff]
  %v129 = vld [vmem:[%s2 + $0x310] sm:$0xff]
  %v130 = vld [vmem:[%s2 + $0x318] sm:$0xff]
  %v131 = vld [vmem:[%s2 + $0x320] sm:$0xff]
  %v132 = vld [vmem:[%s2 + $0x328] sm:$0xff]
  %v133 = vld [vmem:[%s2 + $0x330] sm:$0xff]
  %v134 = vld [vmem:[%s2 + $0x338] sm:$0xff]
  %v135 = vld [vmem:[%s2 + $0x340] sm:$0xff]
  %v136 = vld [vmem:[%s2 + $0x348] sm:$0xff]
  %v137 = vld [vmem:[%s2 + $0x350] sm:$0xff]
  %v138 = vld [vmem:[%s2 + $0x358] sm:$0xff]
  %v139 = vld [vmem:[%s2 + $0x360] sm:$0xff]
  %v140 = vld [vmem:[%s2 + $0x368] sm:$0xff]
  %v141 = vld [vmem:[%s2 + $0x370] sm:$0xff]
  %v142 = vld [vmem:[%s2 + $0x378] sm:$0xff]
  %v143 = vld [vmem:[%s2 + $0x380] sm:$0xff]
  %v144 = vld [vmem:[%s2 + $0x388] sm:$0xff]
  %v145 = vld [vmem:[%s2 + $0x390] sm:$0xff]
  %v146 = vld [vmem:[%s2 + $0x398] sm:$0xff]
  %v147 = vld [vmem:[%s2 + $0x3a0] sm:$0xff]
  %v148 = vld [vmem:[%s2 + $0x3a8] sm:$0xff]
  %v149 = vld [vmem:[%s2 + $0x3b0] sm:$0xff]
  %v150 = vld [vmem:[%s2 + $0x3b8] sm:$0xff]
  %v151 = vld [vmem:[%s2 + $0x3c0] sm:$0xff]
  %v152 = vld [vmem:[%s2 + $0x3c8] sm:$0xff]
  %v153 = vld [vmem:[%s2 + $0x3d0] sm:$0xff]
  %v154 = vld [vmem:[%s2 + $0x3d8] sm:$0xff]
  %v155 = vld [vmem:[%s2 + $0x3e0] sm:$0xff]
  %v156 = vld [vmem:[%s2 + $0x3e8] sm:$0xff]
  %v157 = vld [vmem:[%s2 + $0x3f0] sm:$0xff]
  %v158 = vld [vmem:[%s2 + $0x3f8] sm:$0xff]
  %159 = vmatprep.subr.mxu0 0.0
  %160 = vmatpush1.msra.mxu0 %v46
  %161 = vmatprep.subr.mxu0 0.0
  %162 = vmatpush1.msra.mxu0 %v45
  %163 = vmatprep.subr.mxu0 0.0
  %164 = vmatpush1.msra.mxu0 %v44
  %165 = vmatprep.subr.mxu0 0.0
  %166 = vmatpush1.msra.mxu0 %v43
  %167 = vmatprep.subr.mxu0 0.0
  %168 = vmatpush1.msra.mxu0 %v42
  %169 = vmatprep.subr.mxu0 0.0
  %170 = vmatpush1.msra.mxu0 %v41
  %171 = vmatprep.subr.mxu0 0.0
  %172 = vmatpush1.msra.mxu0 %v40
  %173 = vmatprep.subr.mxu0 0.0
  %174 = vmatpush1.msra.mxu0 %v39
  %175 = vmatprep.subr.mxu0 0.0
  %176 = vmatpush1.msra.mxu0 %v38
  %177 = vmatprep.subr.mxu0 0.0
  %178 = vmatpush1.msra.mxu0 %v37
  %179 = vmatprep.subr.mxu0 0.0
  %180 = vmatpush1.msra.mxu0 %v36
  %181 = vmatprep.subr.mxu0 0.0
  %182 = vmatpush1.msra.mxu0 %v35
  %183 = vmatprep.subr.mxu0 0.0
  %184 = vmatpush1.msra.mxu0 %v34
  %185 = vmatprep.subr.mxu0 0.0
  %186 = vmatpush1.msra.mxu0 %v33
  %187 = vmatprep.subr.mxu0 0.0
  %188 = vmatpush1.msra.mxu0 %v32
  %189 = vmatprep.subr.mxu0 0.0
  %190 = vmatpush1.msra.mxu0 %v31
  %191 = vmatprep.subr.mxu0 0.0
  %192 = vmatpush2.msra.mxu0 %v62
  %193 = vmatprep.subr.mxu0 0.0
  %194 = vmatpush2.msra.mxu0 %v61
  %195 = vmatprep.subr.mxu0 0.0
  %196 = vmatpush2.msra.mxu0 %v60
  %197 = vmatprep.subr.mxu0 0.0
  %198 = vmatpush2.msra.mxu0 %v59
  %199 = vmatprep.subr.mxu0 0.0
  %200 = vmatpush2.msra.mxu0 %v58
  %201 = vmatprep.subr.mxu0 0.0
  %202 = vmatpush2.msra.mxu0 %v57
  %203 = vmatprep.subr.mxu0 0.0
  %204 = vmatpush2.msra.mxu0 %v56
  %205 = vmatprep.subr.mxu0 0.0
  %206 = vmatpush2.msra.mxu0 %v55
  %207 = vmatprep.subr.mxu0 0.0
  %208 = vmatpush2.msra.mxu0 %v54
  %209 = vmatprep.subr.mxu0 0.0
  %210 = vmatpush2.msra.mxu0 %v53
  %211 = vmatprep.subr.mxu0 0.0
  %212 = vmatpush2.msra.mxu0 %v52
  %213 = vmatprep.subr.mxu0 0.0
  %214 = vmatpush2.msra.mxu0 %v51
  %215 = vmatprep.subr.mxu0 0.0
  %216 = vmatpush2.msra.mxu0 %v50
  %217 = vmatprep.subr.mxu0 0.0
  %218 = vmatpush2.msra.mxu0 %v49
  %219 = vmatprep.subr.mxu0 0.0
  %220 = vmatpush2.msra.mxu0 %v48
  %221 = vmatprep.subr.mxu0 0.0
  %222 = vmatpush2.msra.mxu0 %v47
  %223 = vmatprep.mubr.f32.mxu0 %v24
  %224 = vmatmul.mubr.f32.gmra.mxu0 %v23
  %v225 = vpop.f32.mrf.mxu0
  %v226 = vadd.f32 0.0, %v225
  %v227 = vpop.f32.mrf.mxu0
  %228 = vdwg.mxu0
  %229 = vmatprep.subr.mxu0 0.0
  %230 = vmatpush1.msra.mxu0 %v78
  %231 = vmatprep.subr.mxu0 0.0
  %232 = vmatpush1.msra.mxu0 %v77
  %233 = vmatprep.subr.mxu0 0.0
  %234 = vmatpush1.msra.mxu0 %v76
  %235 = vmatprep.subr.mxu0 0.0
  %236 = vmatpush1.msra.mxu0 %v75
  %237 = vmatprep.subr.mxu0 0.0
  %238 = vmatpush1.msra.mxu0 %v74
  %239 = vmatprep.subr.mxu0 0.0
  %240 = vmatpush1.msra.mxu0 %v73
  %241 = vmatprep.subr.mxu0 0.0
  %242 = vmatpush1.msra.mxu0 %v72
  %243 = vmatprep.subr.mxu0 0.0
  %244 = vmatpush1.msra.mxu0 %v71
  %245 = vmatprep.subr.mxu0 0.0
  %246 = vmatpush1.msra.mxu0 %v70
  %247 = vmatprep.subr.mxu0 0.0
  %248 = vmatpush1.msra.mxu0 %v69
  %249 = vmatprep.subr.mxu0 0.0
  %250 = vmatpush1.msra.mxu0 %v68
  %251 = vmatprep.subr.mxu0 0.0
  %252 = vmatpush1.msra.mxu0 %v67
  %253 = vmatprep.subr.mxu0 0.0
  %254 = vmatpush1.msra.mxu0 %v66
  %255 = vmatprep.subr.mxu0 0.0
  %256 = vmatpush1.msra.mxu0 %v65
  %257 = vmatprep.subr.mxu0 0.0
  %258 = vmatpush1.msra.mxu0 %v64
  %259 = vmatprep.subr.mxu0 0.0
  %260 = vmatpush1.msra.mxu0 %v63
  %261 = vmatprep.subr.mxu0 0.0
  %262 = vmatpush2.msra.mxu0 %v94
  %263 = vmatprep.subr.mxu0 0.0
  %264 = vmatpush2.msra.mxu0 %v93
  %265 = vmatprep.subr.mxu0 0.0
  %266 = vmatpush2.msra.mxu0 %v92
  %267 = vmatprep.subr.mxu0 0.0
  %268 = vmatpush2.msra.mxu0 %v91
  %269 = vmatprep.subr.mxu0 0.0
  %270 = vmatpush2.msra.mxu0 %v90
  %271 = vmatprep.subr.mxu0 0.0
  %272 = vmatpush2.msra.mxu0 %v89
  %273 = vmatprep.subr.mxu0 0.0
  %274 = vmatpush2.msra.mxu0 %v88
  %275 = vmatprep.subr.mxu0 0.0
  %276 = vmatpush2.msra.mxu0 %v87
  %277 = vmatprep.subr.mxu0 0.0
  %278 = vmatpush2.msra.mxu0 %v86
  %279 = vmatprep.subr.mxu0 0.0
  %280 = vmatpush2.msra.mxu0 %v85
  %281 = vmatprep.subr.mxu0 0.0
  %282 = vmatpush2.msra.mxu0 %v84
  %283 = vmatprep.subr.mxu0 0.0
  %284 = vmatpush2.msra.mxu0 %v83
  %285 = vmatprep.subr.mxu0 0.0
  %286 = vmatpush2.msra.mxu0 %v82
  %287 = vmatprep.subr.mxu0 0.0
  %288 = vmatpush2.msra.mxu0 %v81
  %289 = vmatprep.subr.mxu0 0.0
  %290 = vmatpush2.msra.mxu0 %v80
  %291 = vmatprep.subr.mxu0 0.0
  %292 = vmatpush2.msra.mxu0 %v79
  %293 = vmatprep.mubr.f32.mxu0 %v26
  %294 = vmatmul.mubr.f32.gmra.mxu0 %v25
  %v295 = vpop.f32.mrf.mxu0
  %v296 = vadd.f32 %v226, %v295
  %v297 = vpop.f32.mrf.mxu0
  %298 = vdwg.mxu0
  %299 = vmatprep.subr.mxu0 0.0
  %300 = vmatpush1.msra.mxu0 %v110
  %301 = vmatprep.subr.mxu0 0.0
  %302 = vmatpush1.msra.mxu0 %v109
  %303 = vmatprep.subr.mxu0 0.0
  %304 = vmatpush1.msra.mxu0 %v108
  %305 = vmatprep.subr.mxu0 0.0
  %306 = vmatpush1.msra.mxu0 %v107
  %307 = vmatprep.subr.mxu0 0.0
  %308 = vmatpush1.msra.mxu0 %v106
  %309 = vmatprep.subr.mxu0 0.0
  %310 = vmatpush1.msra.mxu0 %v105
  %311 = vmatprep.subr.mxu0 0.0
  %312 = vmatpush1.msra.mxu0 %v104
  %313 = vmatprep.subr.mxu0 0.0
  %314 = vmatpush1.msra.mxu0 %v103
  %315 = vmatprep.subr.mxu0 0.0
  %316 = vmatpush1.msra.mxu0 %v102
  %317 = vmatprep.subr.mxu0 0.0
  %318 = vmatpush1.msra.mxu0 %v101
  %319 = vmatprep.subr.mxu0 0.0
  %320 = vmatpush1.msra.mxu0 %v100
  %321 = vmatprep.subr.mxu0 0.0
  %322 = vmatpush1.msra.mxu0 %v99
  %323 = vmatprep.subr.mxu0 0.0
  %324 = vmatpush1.msra.mxu0 %v98
  %325 = vmatprep.subr.mxu0 0.0
  %326 = vmatpush1.msra.mxu0 %v97
  %327 = vmatprep.subr.mxu0 0.0
  %328 = vmatpush1.msra.mxu0 %v96
  %329 = vmatprep.subr.mxu0 0.0
  %330 = vmatpush1.msra.mxu0 %v95
  %331 = vmatprep.subr.mxu0 0.0
  %332 = vmatpush2.msra.mxu0 %v126
  %333 = vmatprep.subr.mxu0 0.0
  %334 = vmatpush2.msra.mxu0 %v125
  %335 = vmatprep.subr.mxu0 0.0
  %336 = vmatpush2.msra.mxu0 %v124
  %337 = vmatprep.subr.mxu0 0.0
  %338 = vmatpush2.msra.mxu0 %v123
  %339 = vmatprep.subr.mxu0 0.0
  %340 = vmatpush2.msra.mxu0 %v122
  %341 = vmatprep.subr.mxu0 0.0
  %342 = vmatpush2.msra.mxu0 %v121
  %343 = vmatprep.subr.mxu0 0.0
  %344 = vmatpush2.msra.mxu0 %v120
  %345 = vmatprep.subr.mxu0 0.0
  %346 = vmatpush2.msra.mxu0 %v119
  %347 = vmatprep.subr.mxu0 0.0
  %348 = vmatpush2.msra.mxu0 %v118
  %349 = vmatprep.subr.mxu0 0.0
  %350 = vmatpush2.msra.mxu0 %v117
  %351 = vmatprep.subr.mxu0 0.0
  %352 = vmatpush2.msra.mxu0 %v116
  %353 = vmatprep.subr.mxu0 0.0
  %354 = vmatpush2.msra.mxu0 %v115
  %355 = vmatprep.subr.mxu0 0.0
  %356 = vmatpush2.msra.mxu0 %v114
  %357 = vmatprep.subr.mxu0 0.0
  %358 = vmatpush2.msra.mxu0 %v113
  %359 = vmatprep.subr.mxu0 0.0
  %360 = vmatpush2.msra.mxu0 %v112
  %361 = vmatprep.subr.mxu0 0.0
  %362 = vmatpush2.msra.mxu0 %v111
  %363 = vmatprep.mubr.f32.mxu0 %v28
  %364 = vmatmul.mubr.f32.gmra.mxu0 %v27
  %v365 = vpop.f32.mrf.mxu0
  %v366 = vadd.f32 %v296, %v365
  %v367 = vpop.f32.mrf.mxu0
  %368 = vdwg.mxu0
  %369 = vmatprep.subr.mxu0 0.0
  %370 = vmatpush1.msra.mxu0 %v142
  %371 = vmatprep.subr.mxu0 0.0
  %372 = vmatpush1.msra.mxu0 %v141
  %373 = vmatprep.subr.mxu0 0.0
  %374 = vmatpush1.msra.mxu0 %v140
  %375 = vmatprep.subr.mxu0 0.0
  %376 = vmatpush1.msra.mxu0 %v139
  %377 = vmatprep.subr.mxu0 0.0
  %378 = vmatpush1.msra.mxu0 %v138
  %379 = vmatprep.subr.mxu0 0.0
  %380 = vmatpush1.msra.mxu0 %v137
  %381 = vmatprep.subr.mxu0 0.0
  %382 = vmatpush1.msra.mxu0 %v136
  %383 = vmatprep.subr.mxu0 0.0
  %384 = vmatpush1.msra.mxu0 %v135
  %385 = vmatprep.subr.mxu0 0.0
  %386 = vmatpush1.msra.mxu0 %v134
  %387 = vmatprep.subr.mxu0 0.0
  %388 = vmatpush1.msra.mxu0 %v133
  %389 = vmatprep.subr.mxu0 0.0
  %390 = vmatpush1.msra.mxu0 %v132
  %391 = vmatprep.subr.mxu0 0.0
  %392 = vmatpush1.msra.mxu0 %v131
  %393 = vmatprep.subr.mxu0 0.0
  %394 = vmatpush1.msra.mxu0 %v130
  %395 = vmatprep.subr.mxu0 0.0
  %396 = vmatpush1.msra.mxu0 %v129
  %397 = vmatprep.subr.mxu0 0.0
  %398 = vmatpush1.msra.mxu0 %v128
  %399 = vmatprep.subr.mxu0 0.0
  %400 = vmatpush1.msra.mxu0 %v127
  %401 = vmatprep.subr.mxu0 0.0
  %402 = vmatpush2.msra.mxu0 %v158
  %403 = vmatprep.subr.mxu0 0.0
  %404 = vmatpush2.msra.mxu0 %v157
  %405 = vmatprep.subr.mxu0 0.0
  %406 = vmatpush2.msra.mxu0 %v156
  %407 = vmatprep.subr.mxu0 0.0
  %408 = vmatpush2.msra.mxu0 %v155
  %409 = vmatprep.subr.mxu0 0.0
  %410 = vmatpush2.msra.mxu0 %v154
  %411 = vmatprep.subr.mxu0 0.0
  %412 = vmatpush2.msra.mxu0 %v153
  %413 = vmatprep.subr.mxu0 0.0
  %414 = vmatpush2.msra.mxu0 %v152
  %415 = vmatprep.subr.mxu0 0.0
  %416 = vmatpush2.msra.mxu0 %v151
  %417 = vmatprep.subr.mxu0 0.0
  %418 = vmatpush2.msra.mxu0 %v150
  %419 = vmatprep.subr.mxu0 0.0
  %420 = vmatpush2.msra.mxu0 %v149
  %421 = vmatprep.subr.mxu0 0.0
  %422 = vmatpush2.msra.mxu0 %v148
  %423 = vmatprep.subr.mxu0 0.0
  %424 = vmatpush2.msra.mxu0 %v147
  %425 = vmatprep.subr.mxu0 0.0
  %426 = vmatpush2.msra.mxu0 %v146
  %427 = vmatprep.subr.mxu0 0.0
  %428 = vmatpush2.msra.mxu0 %v145
  %429 = vmatprep.subr.mxu0 0.0
  %430 = vmatpush2.msra.mxu0 %v144
  %431 = vmatprep.subr.mxu0 0.0
  %432 = vmatpush2.msra.mxu0 %v143
  %433 = vmatprep.mubr.f32.mxu0 %v30
  %434 = vmatmul.mubr.f32.gmra.mxu0 %v29
  %v435 = vpop.f32.mrf.mxu0
  %v436 = vadd.f32 %v366, %v435
  %v437 = vpop.f32.mrf.mxu0
  %438 = vdwg.mxu0
  %v439 = vadd.f32 %v22, %v436
  %vm440 = vcmask 64512
  %441 = vst.msk [vmem:[#allocation2] sm:$0xff] %vm440, %v439
  // Predicated region
  $region18: #{temperature_scaled_forward.1} parent=0 // pred_check
    %p442 = pneg %p16
  $region19: #{temperature_scaled_forward.1} parent=0 // pred_check_branch
    %444 = sbr.rel (%p442) target = $region21
  $region20: #{temperature_scaled_forward.1} parent=0 // pred_region
    %v445 = vld [vmem:[#allocation2] sm:$0xff]
    %v446 = vld [vmem:[%s3] sm:$0x1]
    %v448 = vlaneseq
    %v449 = vshrl.u32 %v448, 7
    %v450 = vsub.s32 0, %v449
    %v451 = vrot.slane %v446, %v450
    %v453 = vadd.f32 %v445, %v451
    %s454 = sld [smem:[#allocation4]]
    %v455 = vstv %s454
    %v456 = vmul.f32 %v453, %v455
    %457 = vst.msk [vmem:[%s4] sm:$0xff] %vm440, %v456
  $region21: #{temperature_scaled_forward.1} parent=0 // pred_fallthru
    _
  // Predicated region
  $region22: #{temperature_scaled_forward.1} parent=0 // pred_check
    _
  $region23: #{temperature_scaled_forward.1} parent=0 // pred_check_branch
    %459 = sbr.rel (0) target = $region25
  $region24: #{temperature_scaled_forward.1} parent=0 // pred_region
    _
  $region25: #{temperature_scaled_forward.1} parent=0 // pred_fallthru
    _
  // Predicated region
  $region26: #{temperature_scaled_forward.1} parent=0 // pred_check
    _
  $region27: #{temperature_scaled_forward.1} parent=0 // pred_check_branch
    %461 = sbr.rel (0) target = $region29
  $region28: #{temperature_scaled_forward.1} parent=0 // pred_region
    _
  $region29: #{temperature_scaled_forward.1} parent=0 // pred_fallthru
    _

</llo_original>
